<compile_context>
chip_gen: v5e
topology: v5e:2x2
jax: 0.10.0
libtpu: 0.0.40
codegen_flags: <defaults>
</compile_context>

<pallas_src>
import functools

import jax
import jax.numpy as jnp
from jax.experimental import pallas as pl
from jax.experimental.pallas import tpu as pltpu


# ----------------------------- config --------------------------------------
CONFIG = {
    "nonlinear_fc": True,
    "fc_dim": 128,
    "n_classes": 3,
    "enc_lstm_dim": 64,
    "encoder_type": "BLSTMEncoder",   # -> inputdim = 2 * enc_lstm_dim = 128
    "dpout_fc": 0.0,
}
INPUT_DIM = 2 * CONFIG["enc_lstm_dim"]          # 128
FC_DIM = CONFIG["fc_dim"]                       # 128
N_CLASSES = CONFIG["n_classes"]                 # 3
N_PAD = 128                                     # lane-dense padded logits width
MAX_TILE_B = 512                                # batch tile (rows per grid step)
PARAM_DTYPE = jnp.bfloat16                      # HBM storage dtype for x / W


def _round_up(x, m):
    return ((x + m - 1) // m) * m


# ----------------------------- kernel ---------------------------------------
def _classifier_kernel(x_ref, w1_ref, b1_ref, w2_ref, b2_ref,
                       w3_ref, b3_ref, o_ref):
    """Fused 3-layer MLP classifier tile.

    x : (TILE_B, inputdim) bf16      w1 : (inputdim, fc_dim) bf16   b1 : (1, fc_dim) f32
    w2: (fc_dim, fc_dim)  bf16       b2 : (1, fc_dim) f32
    w3: (fc_dim, 128)     bf16       b3 : (1, 128) f32   (zero-padded columns)
    o : (TILE_B, 128) f32            -> logits live in o[:, :n_classes]
    """
    x = x_ref[...]
    # Layer 1: bf16 x bf16 MXU matmul, f32 accumulate; bias/tanh in f32.
    h1 = jnp.tanh(
        jnp.dot(x, w1_ref[...], preferred_element_type=jnp.float32) + b1_ref[...]
    )
    h1 = h1.astype(w2_ref.dtype)
    # Layer 2.
    h2 = jnp.tanh(
        jnp.dot(h1, w2_ref[...], preferred_element_type=jnp.float32) + b2_ref[...]
    )
    h2 = h2.astype(w3_ref.dtype)
    # Layer 3 (lane-padded output, unmasked vst).
    o_ref[...] = (
        jnp.dot(h2, w3_ref[...], preferred_element_type=jnp.float32) + b3_ref[...]
    )


# ----------------------------- wrapper --------------------------------------
@functools.partial(jax.jit, static_argnames=("n_classes", "slice_logits"))
def nli_hypoths_forward(v, params, *, n_classes=N_CLASSES, slice_logits=True):
    """Runs the fused classifier on encoder features v: (B, inputdim)."""
    w1, b1, w2, b2, w3p, b3p = params
    batch, in_dim = v.shape
    n_out = w3p.shape[1]

    # Stream activations through HBM in the same (bf16) dtype as the weights.
    v = v.astype(w1.dtype)

    # Batch tiling: cap at MAX_TILE_B, keep the sublane (8) divisibility rule,
    # and pad the batch so every grid step sees a full block.
    tile_b = min(MAX_TILE_B, _round_up(batch, 8))
    b_pad = _round_up(batch, tile_b)
    if b_pad != batch:
        v = jnp.pad(v, ((0, b_pad - batch), (0, 0)))

    grid = (b_pad // tile_b,)

    x_spec = pl.BlockSpec((tile_b, in_dim), lambda i: (i, 0))
    out_spec = pl.BlockSpec((tile_b, n_out), lambda i: (i, 0))

    def resident(shape):
        # Weights/biases: same block every grid step -> stay VMEM-resident.
        return pl.BlockSpec(shape, lambda i: (0, 0))

    out_padded = pl.pallas_call(
        _classifier_kernel,
        out_shape=jax.ShapeDtypeStruct((b_pad, n_out), jnp.float32),
        grid=grid,
        in_specs=[
            x_spec,
            resident(w1.shape), resident(b1.shape),
            resident(w2.shape), resident(b2.shape),
            resident(w3p.shape), resident(b3p.shape),
        ],
        out_specs=out_spec,
        compiler_params=pltpu.CompilerParams(
            dimension_semantics=("parallel",),       # shard over v7x's 2 TCs
            vmem_limit_bytes=32 * 1024 * 1024,       # safe on v5e/v6e/v7x
        ),
    )(v, w1, b1, w2, b2, w3p, b3p)

    if slice_logits:
        return out_padded[:batch, :n_classes]
    return out_padded[:batch]


# ----------------------------- params ---------------------------------------
def init_params(key, dtype=PARAM_DTYPE):
    """nn.Linear-style init U(-1/sqrt(fan_in), 1/sqrt(fan_in)); bf16 weights,
    f32 biases; final layer zero-padded to 128 output lanes (done once here,
    not per forward call)."""
    ks = jax.random.split(key, 6)

    def linear(kw, kb, fan_in, fan_out):
        bound = 1.0 / jnp.sqrt(fan_in)
        w = jax.random.uniform(kw, (fan_in, fan_out), jnp.float32, -bound, bound)
        b = jax.random.uniform(kb, (1, fan_out), jnp.float32, -bound, bound)
        return w, b

    w1, b1 = linear(ks[0], ks[1], INPUT_DIM, FC_DIM)
    w2, b2 = linear(ks[2], ks[3], FC_DIM, FC_DIM)
    w3, b3 = linear(ks[4], ks[5], FC_DIM, N_CLASSES)

    w3p = jnp.zeros((FC_DIM, N_PAD), jnp.float32).at[:, :N_CLASSES].set(w3)
    b3p = jnp.zeros((1, N_PAD), jnp.float32).at[:, :N_CLASSES].set(b3)

    return (w1.astype(dtype), b1.astype(jnp.float32),
            w2.astype(dtype), b2.astype(jnp.float32),
            w3p.astype(dtype), b3p.astype(jnp.float32))


def reference_forward(v, params, n_classes=N_CLASSES):
    """Pure-JAX reference mirroring the kernel's dtype discipline."""
    w1, b1, w2, b2, w3p, b3p = params
    x = v.astype(w1.dtype).astype(jnp.float32)
    h1 = jnp.tanh(x @ w1.astype(jnp.float32) + b1)
    h1 = h1.astype(w2.dtype).astype(jnp.float32)
    h2 = jnp.tanh(h1 @ w2.astype(jnp.float32) + b2)
    h2 = h2.astype(w3p.dtype).astype(jnp.float32)
    out = h2 @ w3p.astype(jnp.float32) + b3p
    return out[:, :n_classes]


# ----------------------------- main ------------------------------------------
if __name__ == "__main__":
    key = jax.random.PRNGKey(0)
    k_params, k_feat = jax.random.split(key)

    params = init_params(k_params)

    batch = 8
    # Synthetic encoder output v = encoder(s2): (batch, inputdim)
    v = jax.random.normal(k_feat, (batch, INPUT_DIM), jnp.float32)

    out = nli_hypoths_forward(v, params)
    out = jax.block_until_ready(out)

    ref = reference_forward(v, params)
    assert out.shape == (batch, N_CLASSES), out.shape
    assert jnp.allclose(out, ref, atol=5e-3, rtol=5e-3), "mismatch vs reference"

    print("KERNEL_OK")
</pallas_src>

<mosaic_0001>
module attributes {stable_mosaic.version = 11 : i64} {
  func.func @_classifier_kernel(%arg0: i32, %arg1: memref<8x128xbf16, #tpu.memory_space<vmem>>, %arg2: memref<128x128xbf16, #tpu.memory_space<vmem>>, %arg3: memref<1x128xf32, #tpu.memory_space<vmem>>, %arg4: memref<128x128xbf16, #tpu.memory_space<vmem>>, %arg5: memref<1x128xf32, #tpu.memory_space<vmem>>, %arg6: memref<128x128xbf16, #tpu.memory_space<vmem>>, %arg7: memref<1x128xf32, #tpu.memory_space<vmem>>, %arg8: memref<8x128xf32, #tpu.memory_space<vmem>>) attributes {dimension_semantics = [#tpu.dimension_semantics<parallel>], iteration_bounds = array<i64: 1>, scalar_prefetch = 0 : i64, scratch_operands = 0 : i64, tpu.core_type = #tpu.core_type<tc>, window_params = [{transform_indices = @transform_0, window_bounds = array<i64: 8, 128>}, {pipeline_mode = #tpu.pipeline_mode<synchronous>, transform_indices = @transform_1, window_bounds = array<i64: 128, 128>}, {pipeline_mode = #tpu.pipeline_mode<synchronous>, transform_indices = @transform_2, window_bounds = array<i64: 1, 128>}, {pipeline_mode = #tpu.pipeline_mode<synchronous>, transform_indices = @transform_3, window_bounds = array<i64: 128, 128>}, {pipeline_mode = #tpu.pipeline_mode<synchronous>, transform_indices = @transform_4, window_bounds = array<i64: 1, 128>}, {pipeline_mode = #tpu.pipeline_mode<synchronous>, transform_indices = @transform_5, window_bounds = array<i64: 128, 128>}, {pipeline_mode = #tpu.pipeline_mode<synchronous>, transform_indices = @transform_6, window_bounds = array<i64: 1, 128>}, {transform_indices = @transform_7, window_bounds = array<i64: 8, 128>}]} {
    %c0 = arith.constant 0 : index
    %c0_0 = arith.constant 0 : index
    %0 = vector.load %arg1[%c0, %c0_0] : memref<8x128xbf16, #tpu.memory_space<vmem>>, vector<8x128xbf16>
    %c0_1 = arith.constant 0 : index
    %c0_2 = arith.constant 0 : index
    %1 = vector.load %arg2[%c0_1, %c0_2] : memref<128x128xbf16, #tpu.memory_space<vmem>>, vector<128x128xbf16>
    %cst = arith.constant dense<0.000000e+00> : vector<8x128xf32>
    %2 = tpu.matmul %0, %1, %cst {dimension_numbers = #tpu.dot_dimension_numbers<[1], [0], [0], [1], [0, 0, 1, 1], [], []>} : vector<8x128xbf16>, vector<128x128xbf16>, vector<8x128xf32> -> vector<8x128xf32>
    %c0_3 = arith.constant 0 : index
    %c0_4 = arith.constant 0 : index
    %3 = vector.load %arg3[%c0_3, %c0_4] : memref<1x128xf32, #tpu.memory_space<vmem>>, vector<1x128xf32>
    %4 = vector.broadcast %3 : vector<1x128xf32> to vector<8x128xf32>
    %5 = arith.addf %2, %4 : vector<8x128xf32>
    %6 = math.tanh %5 : vector<8x128xf32>
    %7 = arith.truncf %6 : vector<8x128xf32> to vector<8x128xbf16>
    %c0_5 = arith.constant 0 : index
    %c0_6 = arith.constant 0 : index
    %8 = vector.load %arg4[%c0_5, %c0_6] : memref<128x128xbf16, #tpu.memory_space<vmem>>, vector<128x128xbf16>
    %cst_7 = arith.constant dense<0.000000e+00> : vector<8x128xf32>
    %9 = tpu.matmul %7, %8, %cst_7 {dimension_numbers = #tpu.dot_dimension_numbers<[1], [0], [0], [1], [0, 0, 1, 1], [], []>} : vector<8x128xbf16>, vector<128x128xbf16>, vector<8x128xf32> -> vector<8x128xf32>
    %c0_8 = arith.constant 0 : index
    %c0_9 = arith.constant 0 : index
    %10 = vector.load %arg5[%c0_8, %c0_9] : memref<1x128xf32, #tpu.memory_space<vmem>>, vector<1x128xf32>
    %11 = vector.broadcast %10 : vector<1x128xf32> to vector<8x128xf32>
    %12 = arith.addf %9, %11 : vector<8x128xf32>
    %13 = math.tanh %12 : vector<8x128xf32>
    %14 = arith.truncf %13 : vector<8x128xf32> to vector<8x128xbf16>
    %c0_10 = arith.constant 0 : index
    %c0_11 = arith.constant 0 : index
    %15 = vector.load %arg6[%c0_10, %c0_11] : memref<128x128xbf16, #tpu.memory_space<vmem>>, vector<128x128xbf16>
    %cst_12 = arith.constant dense<0.000000e+00> : vector<8x128xf32>
    %16 = tpu.matmul %14, %15, %cst_12 {dimension_numbers = #tpu.dot_dimension_numbers<[1], [0], [0], [1], [0, 0, 1, 1], [], []>} : vector<8x128xbf16>, vector<128x128xbf16>, vector<8x128xf32> -> vector<8x128xf32>
    %c0_13 = arith.constant 0 : index
    %c0_14 = arith.constant 0 : index
    %17 = vector.load %arg7[%c0_13, %c0_14] : memref<1x128xf32, #tpu.memory_space<vmem>>, vector<1x128xf32>
    %18 = vector.broadcast %17 : vector<1x128xf32> to vector<8x128xf32>
    %19 = arith.addf %16, %18 : vector<8x128xf32>
    %c0_15 = arith.constant 0 : index
    %c0_16 = arith.constant 0 : index
    %20 = vector.load %arg8[%c0_15, %c0_16] : memref<8x128xf32, #tpu.memory_space<vmem>>, vector<8x128xf32>
    tpu.vector_store %arg8[%c0_15, %c0_16], %19 {strides = array<i32>} : memref<8x128xf32, #tpu.memory_space<vmem>>, vector<8x128xf32>,
    return
  }
  func.func @transform_0(%arg0: i32) -> (i32, i32) {
    %c0_i32 = arith.constant 0 : i32
    %c0_i32_0 = arith.constant 0 : i32
    return %arg0, %c0_i32 : i32, i32
  }
  func.func @transform_1(%arg0: i32) -> (i32, i32) {
    %c0_i32 = arith.constant 0 : i32
    %c0_i32_0 = arith.constant 0 : i32
    %c0_i32_1 = arith.constant 0 : i32
    return %c0_i32, %c0_i32_0 : i32, i32
  }
  func.func @transform_2(%arg0: i32) -> (i32, i32) {
    %c0_i32 = arith.constant 0 : i32
    %c0_i32_0 = arith.constant 0 : i32
    %c0_i32_1 = arith.constant 0 : i32
    return %c0_i32, %c0_i32_0 : i32, i32
  }
  func.func @transform_3(%arg0: i32) -> (i32, i32) {
    %c0_i32 = arith.constant 0 : i32
    %c0_i32_0 = arith.constant 0 : i32
    %c0_i32_1 = arith.constant 0 : i32
    return %c0_i32, %c0_i32_0 : i32, i32
  }
  func.func @transform_4(%arg0: i32) -> (i32, i32) {
    %c0_i32 = arith.constant 0 : i32
    %c0_i32_0 = arith.constant 0 : i32
    %c0_i32_1 = arith.constant 0 : i32
    return %c0_i32, %c0_i32_0 : i32, i32
  }
  func.func @transform_5(%arg0: i32) -> (i32, i32) {
    %c0_i32 = arith.constant 0 : i32
    %c0_i32_0 = arith.constant 0 : i32
    %c0_i32_1 = arith.constant 0 : i32
    return %c0_i32, %c0_i32_0 : i32, i32
  }
  func.func @transform_6(%arg0: i32) -> (i32, i32) {
    %c0_i32 = arith.constant 0 : i32
    %c0_i32_0 = arith.constant 0 : i32
    %c0_i32_1 = arith.constant 0 : i32
    return %c0_i32, %c0_i32_0 : i32, i32
  }
  func.func @transform_7(%arg0: i32) -> (i32, i32) {
    %c0_i32 = arith.constant 0 : i32
    %c0_i32_0 = arith.constant 0 : i32
    return %arg0, %c0_i32 : i32, i32
  }
}

</mosaic_0001>

<llo_original>
// kernel: nli_hypoths_forward.1
$region0: #{nli_hypoths_forward.1}
  #allocation0 [shape = 'u32[]', space=smem, size = 0x4, offset = 0x4, fixed_abs, tag = 'smem constant byte address 0x4 - core index']
  #allocation1 [shape = 'u32[72,128]{1,0:T(1,128)}', space=vmem, size = 0x9000, scoped, tag = 'internal scratch']
  %s0 = inlined_call_operand.vmem [shape: bf16[8,128], index: 0, kind: input, shape index: {}]
  %s1 = inlined_call_operand.hbm [shape: bf16[128,128], index: 1, kind: input, shape index: {}]
  %s2 = inlined_call_operand.vmem [shape: f32[1,128], index: 2, kind: input, shape index: {}]
  %s3 = inlined_call_operand.hbm [shape: bf16[128,128], index: 3, kind: input, shape index: {}]
  %s4 = inlined_call_operand.vmem [shape: f32[1,128], index: 4, kind: input, shape index: {}]
  %s5 = inlined_call_operand.hbm [shape: bf16[128,128], index: 5, kind: input, shape index: {}]
  %s6 = inlined_call_operand.vmem [shape: f32[1,128], index: 6, kind: input, shape index: {}]
  %s7 = inlined_call_operand.vmem [shape: f32[8,128], index: 7, kind: output, shape index: {}]
  %s8 = sld [smem:[#allocation0]]
  $region50: #{nli_hypoths_forward.1} parent=0
    _
  %s10 = ssub.s32 1, %s8
  %s11 = scalar_select 0, %s10, %s8
  $region1: #{nli_hypoths_forward.1} parent=0
    #allocation2 [shape = 'u8[32768]{0}', space=vmem, size = 0x8000, scoped, tag = 'input window, operand 1, single buffered']
    #allocation3 [shape = 's32[1]{0}', space=sflag, size = 0x4, scoped, tag = 'scoped memory for nli_hypoths_forward.1']
    #allocation4 [shape = 'u8[32768]{0}', space=vmem, size = 0x8000, scoped, tag = 'input window, operand 3, single buffered']
    #allocation5 [shape = 's32[1]{0}', space=sflag, size = 0x4, scoped, tag = 'scoped memory for nli_hypoths_forward.1']
    #allocation6 [shape = 'u8[32768]{0}', space=vmem, size = 0x8000, scoped, tag = 'input window, operand 5, single buffered']
    %12 = vsyncpa [#allocation3], 0
    %13 = vsyncpa [#allocation5], 0
    // Predicated region
    $region2: #{nli_hypoths_forward.1} parent=1 // pred_check
      _
    $region3: #{nli_hypoths_forward.1} parent=1 // pred_check_branch
      %15 = sbr.rel (0) target = $region5
    $region4: #{nli_hypoths_forward.1} parent=1 // pred_region
      _
    $region5: #{nli_hypoths_forward.1} parent=1 // pred_fallthru
      _
    // Predicated region
    $region6: #{nli_hypoths_forward.1} parent=1 // pred_check
      _
    $region7: #{nli_hypoths_forward.1} parent=1 // pred_check_branch
      %17 = sbr.rel (0) target = $region9
    $region8: #{nli_hypoths_forward.1} parent=1 // pred_region
      %19 = vsyncadd [#allocation3], 0
      %s20 = sshll.u32 %s1, 4
      %s21 = int_to_ptr.hbm [resolvable:$true] %s20
      %s22 = sshll.u32 [#allocation2], 4
      %s23 = int_to_ptr.vmem [resolvable:$true] %s22
      %28 = dma.hbm_to_vmem [thread:$0]  %s21, 1024, %s23, [#allocation3], 64, 64, 4
    $region9: #{nli_hypoths_forward.1} parent=1 // pred_fallthru
      _
    // Predicated region
    $region10: #{nli_hypoths_forward.1} parent=1 // pred_check
      _
    $region11: #{nli_hypoths_forward.1} parent=1 // pred_check_branch
      %30 = sbr.rel (0) target = $region13
    $region12: #{nli_hypoths_forward.1} parent=1 // pred_region
      _
    $region13: #{nli_hypoths_forward.1} parent=1 // pred_fallthru
      _
    // Predicated region
    $region14: #{nli_hypoths_forward.1} parent=1 // pred_check
      _
    $region15: #{nli_hypoths_forward.1} parent=1 // pred_check_branch
      %32 = sbr.rel (0) target = $region17
    $region16: #{nli_hypoths_forward.1} parent=1 // pred_region
      %34 = vsyncadd [#allocation5], 0
      %s35 = sshll.u32 %s3, 4
      %s36 = int_to_ptr.hbm [resolvable:$true] %s35
      %s37 = sshll.u32 [#allocation4], 4
      %s38 = int_to_ptr.vmem [resolvable:$true] %s37
      %43 = dma.hbm_to_vmem [thread:$0]  %s36, 1024, %s38, [#allocation5], 64, 64, 4
    $region17: #{nli_hypoths_forward.1} parent=1 // pred_fallthru
      _
    // Predicated region
    $region18: #{nli_hypoths_forward.1} parent=1 // pred_check
      _
    $region19: #{nli_hypoths_forward.1} parent=1 // pred_check_branch
      %45 = sbr.rel (0) target = $region21
    $region20: #{nli_hypoths_forward.1} parent=1 // pred_region
      _
    $region21: #{nli_hypoths_forward.1} parent=1 // pred_fallthru
      _
    // Predicated region
    $region22: #{nli_hypoths_forward.1} parent=1 // pred_check
      _
    $region23: #{nli_hypoths_forward.1} parent=1 // pred_check_branch
      %47 = sbr.rel (0) target = $region25
    $region24: #{nli_hypoths_forward.1} parent=1 // pred_region
      %49 = vsyncadd [#allocation5], 0
      %s50 = sshll.u32 %s5, 4
      %s51 = int_to_ptr.hbm [resolvable:$true] %s50
      %s52 = sshll.u32 [#allocation6], 4
      %s53 = int_to_ptr.vmem [resolvable:$true] %s52
      %58 = dma.hbm_to_vmem [thread:$0]  %s51, 1024, %s53, [#allocation5], 64, 64, 4
    $region25: #{nli_hypoths_forward.1} parent=1 // pred_fallthru
      _
    // Predicated region
    $region26: #{nli_hypoths_forward.1} parent=1 // pred_check
      _
    $region27: #{nli_hypoths_forward.1} parent=1 // pred_check_branch
      %60 = sbr.rel (0) target = $region29
    $region28: #{nli_hypoths_forward.1} parent=1 // pred_region
      _
    $region29: #{nli_hypoths_forward.1} parent=1 // pred_fallthru
      _
    // Predicated region
    $region30: #{nli_hypoths_forward.1} parent=1 // pred_check
      _
    $region31: #{nli_hypoths_forward.1} parent=1 // pred_check_branch
      %62 = sbr.rel (0) target = $region33
    $region32: #{nli_hypoths_forward.1} parent=1 // pred_region
      %64 = dma.done [#allocation3], 1024
    $region33: #{nli_hypoths_forward.1} parent=1 // pred_fallthru
      _
    // Predicated region
    $region34: #{nli_hypoths_forward.1} parent=1 // pred_check
      _
    $region35: #{nli_hypoths_forward.1} parent=1 // pred_check_branch
      %66 = sbr.rel (0) target = $region37
    $region36: #{nli_hypoths_forward.1} parent=1 // pred_region
      %68 = dma.done [#allocation5], 1024
    $region37: #{nli_hypoths_forward.1} parent=1 // pred_fallthru
      _
    // Predicated region
    $region38: #{nli_hypoths_forward.1} parent=1 // pred_check
      _
    $region39: #{nli_hypoths_forward.1} parent=1 // pred_check_branch
      %70 = sbr.rel (0) target = $region41
    $region40: #{nli_hypoths_forward.1} parent=1 // pred_region
      %72 = dma.done [#allocation5], 1024
    $region41: #{nli_hypoths_forward.1} parent=1 // pred_fallthru
      _
    %v73 = vld [vmem:[%s0] sm:$0xf]
    %v74 = vld [vmem:[#allocation2] sm:$0xf]
    %v75 = vld [vmem:[#allocation2 + $0x4] sm:$0xf]
    %v76 = vld [vmem:[#allocation2 + $0x8] sm:$0xf]
    %v77 = vld [vmem:[#allocation2 + $0xc] sm:$0xf]
    %v78 = vld [vmem:[#allocation2 + $0x10] sm:$0xf]
    %v79 = vld [vmem:[#allocation2 + $0x14] sm:$0xf]
    %v80 = vld [vmem:[#allocation2 + $0x18] sm:$0xf]
    %v81 = vld [vmem:[#allocation2 + $0x1c] sm:$0xf]
    %v82 = vld [vmem:[#allocation2 + $0x20] sm:$0xf]
    %v83 = vld [vmem:[#allocation2 + $0x24] sm:$0xf]
    %v84 = vld [vmem:[#allocation2 + $0x28] sm:$0xf]
    %v85 = vld [vmem:[#allocation2 + $0x2c] sm:$0xf]
    %v86 = vld [vmem:[#allocation2 + $0x30] sm:$0xf]
    %v87 = vld [vmem:[#allocation2 + $0x34] sm:$0xf]
    %v88 = vld [vmem:[#allocation2 + $0x38] sm:$0xf]
    %v89 = vld [vmem:[#allocation2 + $0x3c] sm:$0xf]
    %v90 = vld [vmem:[%s2] sm:$0x1]
    %v92 = vperm.slane %v90, 0
    %v110 = vunpack.c.l.b16 %v74
    %v111 = vunpack.c.l.b16 %v75
    %v112 = vunpack.c.l.b16 %v76
    %v113 = vunpack.c.l.b16 %v77
    %v114 = vunpack.c.l.b16 %v78
    %v115 = vunpack.c.l.b16 %v79
    %v116 = vunpack.c.l.b16 %v80
    %v117 = vunpack.c.l.b16 %v81
    %v118 = vunpack.c.l.b16 %v82
    %v119 = vunpack.c.l.b16 %v83
    %v120 = vunpack.c.l.b16 %v84
    %v121 = vunpack.c.l.b16 %v85
    %v122 = vunpack.c.l.b16 %v86
    %v123 = vunpack.c.l.b16 %v87
    %v124 = vunpack.c.l.b16 %v88
    %v125 = vunpack.c.l.b16 %v89
    %v126 = vpack.c.b16 %v111, %v110
    %v127 = vpack.c.b16 %v113, %v112
    %v128 = vpack.c.b16 %v115, %v114
    %v129 = vpack.c.b16 %v117, %v116
    %v130 = vpack.c.b16 %v119, %v118
    %v131 = vpack.c.b16 %v121, %v120
    %v132 = vpack.c.b16 %v123, %v122
    %v133 = vpack.c.b16 %v125, %v124
    %142 = vmatpush.bf16.msra.mxu0 %v133
    %143 = vmatpush.bf16.msra.mxu0 %v132
    %144 = vmatpush.bf16.msra.mxu0 %v131
    %145 = vmatpush.bf16.msra.mxu0 %v130
    %146 = vmatpush.bf16.msra.mxu0 %v129
    %147 = vmatpush.bf16.msra.mxu0 %v128
    %148 = vmatpush.bf16.msra.mxu0 %v127
    %149 = vmatpush.bf16.msra.mxu0 %v126
    %150 = vmatmul.bf16.gmra.mxu0 %v73
    %v151 = vpop.f32.mrf.mxu0
    %v152 = vadd.f32 %v92, %v151
    %v153 = vpop.f32.mrf.mxu0
    %154 = vdwg.mxu0
    %v155 = vtanh.pop %v152
    %v156 = vpack.c.bf16 %v155, %v155
    %v157 = vld [vmem:[#allocation4] sm:$0xf]
    %v158 = vld [vmem:[#allocation4 + $0x4] sm:$0xf]
    %v159 = vld [vmem:[#allocation4 + $0x8] sm:$0xf]
    %v160 = vld [vmem:[#allocation4 + $0xc] sm:$0xf]
    %v161 = vld [vmem:[#allocation4 + $0x10] sm:$0xf]
    %v162 = vld [vmem:[#allocation4 + $0x14] sm:$0xf]
    %v163 = vld [vmem:[#allocation4 + $0x18] sm:$0xf]
    %v164 = vld [vmem:[#allocation4 + $0x1c] sm:$0xf]
    %v165 = vld [vmem:[#allocation4 + $0x20] sm:$0xf]
    %v166 = vld [vmem:[#allocation4 + $0x24] sm:$0xf]
    %v167 = vld [vmem:[#allocation4 + $0x28] sm:$0xf]
    %v168 = vld [vmem:[#allocation4 + $0x2c] sm:$0xf]
    %v169 = vld [vmem:[#allocation4 + $0x30] sm:$0xf]
    %v170 = vld [vmem:[#allocation4 + $0x34] sm:$0xf]
    %v171 = vld [vmem:[#allocation4 + $0x38] sm:$0xf]
    %v172 = vld [vmem:[#allocation4 + $0x3c] sm:$0xf]
    %v173 = vld [vmem:[%s4] sm:$0x1]
    %v175 = vperm.slane %v173, 0
    %v193 = vunpack.c.l.b16 %v157
    %v194 = vunpack.c.l.b16 %v158
    %v195 = vunpack.c.l.b16 %v159
    %v196 = vunpack.c.l.b16 %v160
    %v197 = vunpack.c.l.b16 %v161
    %v198 = vunpack.c.l.b16 %v162
    %v199 = vunpack.c.l.b16 %v163
    %v200 = vunpack.c.l.b16 %v164
    %v201 = vunpack.c.l.b16 %v165
    %v202 = vunpack.c.l.b16 %v166
    %v203 = vunpack.c.l.b16 %v167
    %v204 = vunpack.c.l.b16 %v168
    %v205 = vunpack.c.l.b16 %v169
    %v206 = vunpack.c.l.b16 %v170
    %v207 = vunpack.c.l.b16 %v171
    %v208 = vunpack.c.l.b16 %v172
    %v209 = vpack.c.b16 %v194, %v193
    %v210 = vpack.c.b16 %v196, %v195
    %v211 = vpack.c.b16 %v198, %v197
    %v212 = vpack.c.b16 %v200, %v199
    %v213 = vpack.c.b16 %v202, %v201
    %v214 = vpack.c.b16 %v204, %v203
    %v215 = vpack.c.b16 %v206, %v205
    %v216 = vpack.c.b16 %v208, %v207
    %225 = vmatpush.bf16.msra.mxu0 %v216
    %226 = vmatpush.bf16.msra.mxu0 %v215
    %227 = vmatpush.bf16.msra.mxu0 %v214
    %228 = vmatpush.bf16.msra.mxu0 %v213
    %229 = vmatpush.bf16.msra.mxu0 %v212
    %230 = vmatpush.bf16.msra.mxu0 %v211
    %231 = vmatpush.bf16.msra.mxu0 %v210
    %232 = vmatpush.bf16.msra.mxu0 %v209
    %233 = vmatmul.bf16.gmra.mxu0 %v156
    %v234 = vpop.f32.mrf.mxu0
    %v235 = vadd.f32 %v175, %v234
    %v236 = vpop.f32.mrf.mxu0
    %237 = vdwg.mxu0
    %v238 = vtanh.pop %v235
    %v239 = vpack.c.bf16 %v238, %v238
    %v240 = vld [vmem:[#allocation6] sm:$0xf]
    %v241 = vld [vmem:[#allocation6 + $0x4] sm:$0xf]
    %v242 = vld [vmem:[#allocation6 + $0x8] sm:$0xf]
    %v243 = vld [vmem:[#allocation6 + $0xc] sm:$0xf]
    %v244 = vld [vmem:[#allocation6 + $0x10] sm:$0xf]
    %v245 = vld [vmem:[#allocation6 + $0x14] sm:$0xf]
    %v246 = vld [vmem:[#allocation6 + $0x18] sm:$0xf]
    %v247 = vld [vmem:[#allocation6 + $0x1c] sm:$0xf]
    %v248 = vld [vmem:[#allocation6 + $0x20] sm:$0xf]
    %v249 = vld [vmem:[#allocation6 + $0x24] sm:$0xf]
    %v250 = vld [vmem:[#allocation6 + $0x28] sm:$0xf]
    %v251 = vld [vmem:[#allocation6 + $0x2c] sm:$0xf]
    %v252 = vld [vmem:[#allocation6 + $0x30] sm:$0xf]
    %v253 = vld [vmem:[#allocation6 + $0x34] sm:$0xf]
    %v254 = vld [vmem:[#allocation6 + $0x38] sm:$0xf]
    %v255 = vld [vmem:[#allocation6 + $0x3c] sm:$0xf]
    %v256 = vld [vmem:[%s6] sm:$0x1]
    %v258 = vperm.slane %v256, 0
    %v276 = vunpack.c.l.b16 %v240
    %v277 = vunpack.c.l.b16 %v241
    %v278 = vunpack.c.l.b16 %v242
    %v279 = vunpack.c.l.b16 %v243
    %v280 = vunpack.c.l.b16 %v244
    %v281 = vunpack.c.l.b16 %v245
    %v282 = vunpack.c.l.b16 %v246
    %v283 = vunpack.c.l.b16 %v247
    %v284 = vunpack.c.l.b16 %v248
    %v285 = vunpack.c.l.b16 %v249
    %v286 = vunpack.c.l.b16 %v250
    %v287 = vunpack.c.l.b16 %v251
    %v288 = vunpack.c.l.b16 %v252
    %v289 = vunpack.c.l.b16 %v253
    %v290 = vunpack.c.l.b16 %v254
    %v291 = vunpack.c.l.b16 %v255
    %v292 = vpack.c.b16 %v277, %v276
    %v293 = vpack.c.b16 %v279, %v278
    %v294 = vpack.c.b16 %v281, %v280
    %v295 = vpack.c.b16 %v283, %v282
    %v296 = vpack.c.b16 %v285, %v284
    %v297 = vpack.c.b16 %v287, %v286
    %v298 = vpack.c.b16 %v289, %v288
    %v299 = vpack.c.b16 %v291, %v290
    %308 = vmatpush.bf16.msra.mxu0 %v299
    %309 = vmatpush.bf16.msra.mxu0 %v298
    %310 = vmatpush.bf16.msra.mxu0 %v297
    %311 = vmatpush.bf16.msra.mxu0 %v296
    %312 = vmatpush.bf16.msra.mxu0 %v295
    %313 = vmatpush.bf16.msra.mxu0 %v294
    %314 = vmatpush.bf16.msra.mxu0 %v293
    %315 = vmatpush.bf16.msra.mxu0 %v292
    %316 = vmatmul.bf16.gmra.mxu0 %v239
    %v317 = vpop.f32.mrf.mxu0
    %v318 = vadd.f32 %v258, %v317
    %v319 = vpop.f32.mrf.mxu0
    %320 = vdwg.mxu0
    %321 = vst [vmem:[%s7] sm:$0xff] %v318
    // Predicated region
    $region42: #{nli_hypoths_forward.1} parent=1 // pred_check
      _
    $region43: #{nli_hypoths_forward.1} parent=1 // pred_check_branch
      %323 = sbr.rel (0) target = $region45
    $region44: #{nli_hypoths_forward.1} parent=1 // pred_region
      _
    $region45: #{nli_hypoths_forward.1} parent=1 // pred_fallthru
      _
    // Predicated region
    $region46: #{nli_hypoths_forward.1} parent=1 // pred_check
      _
    $region47: #{nli_hypoths_forward.1} parent=1 // pred_check_branch
      %325 = sbr.rel (0) target = $region49
    $region48: #{nli_hypoths_forward.1} parent=1 // pred_region
      _
    $region49: #{nli_hypoths_forward.1} parent=1 // pred_fallthru
      _
    %326 = vsyncpa [#allocation3], 1
    %327 = vsyncpa [#allocation5], 1

</llo_original>
